<compile_context>
chip_gen: v5e
topology: v5e:2x2
jax: 0.10.0
libtpu: 0.0.40
codegen_flags: <defaults>
</compile_context>

<pallas_src>
import functools

import jax
import jax.numpy as jnp
from jax.experimental import pallas as pl
from jax.experimental.pallas import tpu as pltpu


# ----------------------------------------------------------------------------
# Pass 1: per-node projections  proj = [ relu(A h) | (B h)/2 ]
# ----------------------------------------------------------------------------
def _project_kernel(h_ref, wab_ref, bab_ref, proj_ref, *, feat):
    hh = h_ref[...].astype(wab_ref.dtype)              # bf16 MXU operands in bf16 mode
    ab = (jnp.dot(hh, wab_ref[...], preferred_element_type=jnp.float32)
          + bab_ref[...])                              # [T, 2F] f32
    proj_ref[:, :feat] = jnp.maximum(ab[:, :feat], 0.0).astype(proj_ref.dtype)
    proj_ref[:, feat:] = (ab[:, feat:] * 0.5).astype(proj_ref.dtype)


# ----------------------------------------------------------------------------
# Pass 2: edge cube max-aggregation + NodeApply + normalize + relu + residual
# ----------------------------------------------------------------------------
def _edge_aggregate_kernel(h_ref, bhd_ref, proj_src_ref, adjT_ref,
                           wnh_ref, wnc_ref, bn_ref, out_ref, c_ref,
                           *, feat, src_chunk):
    j = pl.program_id(1)
    cdt = c_ref.dtype

    # ---- per-dst-tile init (first src tile only) ----------------------------
    @pl.when(j == 0)
    def _():
        c_ref[...] = jnp.zeros_like(c_ref)

    bhd = bhd_ref[...]                                  # (Bh_dst)/2   [T_dst, F]
    n_chunks = proj_src_ref.shape[0] // src_chunk

    # ---- edge cube, chunked over src, fully unrolled (static trip count) ----
    for k in range(n_chunks):
        r0 = k * src_chunk
        a_src = proj_src_ref[r0:r0 + src_chunk, :feat]  # relu(Ah_src) >= 0  [C, F]
        b_src = proj_src_ref[r0:r0 + src_chunk, feat:]  # (Bh_src)/2         [C, F]
        msk = adjT_ref[r0:r0 + src_chunk, :]            # 0/1                [C, T_dst]
        # Saturating bias folds the adjacency mask into the tanh argument:
        # masked edges get tanh(.) == -1 exactly -> zero contribution.
        bias = ((msk.astype(jnp.float32) - 1.0) * 20.0).astype(cdt)
        e_half = b_src[:, None, :] + bhd[None, :, :] + bias[:, :, None]
        # sigmoid(e) = 0.5*tanh(e/2) + 0.5 ; the /2 is pre-folded into proj and
        # the outer 0.5 is deferred past the max (all terms >= 0), so c_ref
        # accumulates 2*c.
        g = (jnp.tanh(e_half) + 1.0) * a_src[:, None, :]          # [C, T_dst, F]
        c_ref[...] = jnp.maximum(c_ref[...], jnp.max(g, axis=0))

    # ---- NodeApply + normalize + relu + residual (last src tile only) -------
    @pl.when(j == pl.num_programs(1) - 1)
    def _():
        h = h_ref[...]                                  # f32 [T_dst, F]
        hm = h.astype(wnh_ref.dtype)
        cm = c_ref[...] * 0.5                           # undo the deferred 0.5
        bundle = (jnp.dot(hm, wnh_ref[...], preferred_element_type=jnp.float32)
                  + jnp.dot(cm.astype(wnc_ref.dtype), wnc_ref[...],
                            preferred_element_type=jnp.float32)
                  + bn_ref[...])                        # [T_dst, F] f32
        # F.normalize(x, p=2, dim=1) == x * rsqrt(max(||x||^2, 1e-24))
        sumsq = jnp.sum(bundle * bundle, axis=1, keepdims=True)
        bundle = bundle * jax.lax.rsqrt(jnp.maximum(sumsq, 1e-24))
        bundle = jnp.maximum(bundle, 0.0)               # activation (ReLU)
        out_ref[...] = h + bundle                       # residual


def graphsage_layer_edgefeat(h, adj, params, *,
                             tile_dst=128, tile_src=128, src_chunk=32,
                             compute_dtype=jnp.float32):
    """h: [N, F] f32.  adj: [N_dst, N_src] 0/1 mask (adj[i, j]=1 iff edge j->i).

    compute_dtype=jnp.bfloat16 runs the whole edge cube / MXU path in bf16
    (recommended on v6e/v7x); f32 keeps full fidelity (recommended on v5e).
    For large graphs on v5e/v6e (128 MiB VMEM) tile_dst/tile_src can be raised
    to 256 to amortize per-grid-step overhead.
    """
    N, F = h.shape
    t_dst = N if N < tile_dst else tile_dst
    t_src = N if N < tile_src else tile_src
    assert N % t_dst == 0 and N % t_src == 0, "N must be a multiple of the tile size"
    chunk = min(src_chunk, t_src)
    assert t_src % chunk == 0

    cdt = compute_dtype

    # Fused A|B weights for the projection; NodeApply weights kept split so the
    # epilogue can use two K=F dots (no lane-concat copy of [T, 2F]).
    wab = jnp.concatenate([params["wa"], params["wb"]], axis=1).astype(cdt)  # [F, 2F]
    bab = jnp.concatenate([params["ba"], params["bb"]], axis=1)              # [1, 2F] f32
    wnh = params["wnh"].astype(cdt)                                          # [F, F]
    wnc = params["wnc"].astype(cdt)                                          # [F, F]
    bn = params["bn"]                                                        # [1, F] f32

    # Adjacency transposed to [src, dst]; int8 where the tile shape allows it
    # (quarter of the f32 N^2 stream), bf16 fallback for small ragged tiles.
    adj_dtype = jnp.int8 if (t_dst % 128 == 0 and t_src % 32 == 0) else jnp.bfloat16
    adjT = (adj.T != 0).astype(adj_dtype)

    # ---- Pass 1: proj = [ relu(A h) | (B h)/2 ], computed once over N -------
    proj = pl.pallas_call(
        functools.partial(_project_kernel, feat=F),
        out_shape=jax.ShapeDtypeStruct((N, 2 * F), cdt),
        grid_spec=pltpu.PrefetchScalarGridSpec(
            num_scalar_prefetch=0,
            grid=(N // t_dst,),
            in_specs=[
                pl.BlockSpec((t_dst, F), lambda i: (i, 0)),       # h rows
                pl.BlockSpec((F, 2 * F), lambda i: (0, 0)),       # W_A | W_B
                pl.BlockSpec((1, 2 * F), lambda i: (0, 0)),       # b_A | b_B
            ],
            out_specs=pl.BlockSpec((t_dst, 2 * F), lambda i: (i, 0))),
        compiler_params=pltpu.CompilerParams(
            dimension_semantics=("parallel",)),
    )(h, wab, bab)

    # ---- Pass 2: aggregation + NodeApply -------------------------------------
    kernel = functools.partial(_edge_aggregate_kernel, feat=F, src_chunk=chunk)
    grid = (N // t_dst, N // t_src)
    return pl.pallas_call(
        kernel,
        out_shape=jax.ShapeDtypeStruct((N, F), jnp.float32),
        grid_spec=pltpu.PrefetchScalarGridSpec(
            num_scalar_prefetch=0,
            grid=grid,
            in_specs=[
                pl.BlockSpec((t_dst, F), lambda i, j: (i, 0)),       # h (dst rows, f32)
                pl.BlockSpec((t_dst, F), lambda i, j: (i, 1)),       # (Bh_dst)/2
                pl.BlockSpec((t_src, 2 * F), lambda i, j: (j, 0)),   # relu(Ah)|Bh/2 src
                pl.BlockSpec((t_src, t_dst), lambda i, j: (j, i)),   # adj^T tile
                pl.BlockSpec((F, F), lambda i, j: (0, 0)),           # W_node (h half)
                pl.BlockSpec((F, F), lambda i, j: (0, 0)),           # W_node (c half)
                pl.BlockSpec((1, F), lambda i, j: (0, 0)),           # b_node
            ],
            out_specs=pl.BlockSpec((t_dst, F), lambda i, j: (i, 0)),
            scratch_shapes=[
                pltpu.VMEM((t_dst, F), cdt),     # running max (stores 2*c)
            ]),
        compiler_params=pltpu.CompilerParams(
            dimension_semantics=("parallel", "arbitrary"),
            vmem_limit_bytes=32 * 1024 * 1024),
    )(h, proj, proj, adjT, wnh, wnc, bn)


def reference(h, adj, params):
    """Pure-JAX reference of the same forward pass (matches the PyTorch layer)."""
    Ah = h @ params["wa"] + params["ba"]
    Bh = h @ params["wb"] + params["bb"]
    e = Bh[:, None, :] + Bh[None, :, :]
    m = jnp.maximum(jax.nn.sigmoid(e) * Ah[None, :, :], 0.0)
    masked = jnp.where(adj[:, :, None] > 0.5, m, -1e30)
    c = jnp.max(masked, axis=1)
    bundle = h @ params["wnh"] + c @ params["wnc"] + params["bn"]
    norm = jnp.sqrt(jnp.sum(bundle * bundle, axis=1, keepdims=True))
    bundle = bundle / jnp.maximum(norm, 1e-12)
    bundle = jnp.maximum(bundle, 0.0)
    return h + bundle


if __name__ == "__main__":
    def make_inputs(n, f, key):
        kh, kadj, k1, k2, k3, k4, k5, k6, k7 = jax.random.split(key, 9)
        h = jax.random.normal(kh, (n, f), dtype=jnp.float32)
        adj = (jax.random.uniform(kadj, (n, n)) < 0.3).astype(jnp.float32)
        adj = jnp.maximum(adj, jnp.eye(n, dtype=jnp.float32))   # self-loops
        params = {
            "wa":  0.1 * jax.random.normal(k1, (f, f), dtype=jnp.float32),
            "ba":  0.1 * jax.random.normal(k2, (1, f), dtype=jnp.float32),
            "wb":  0.1 * jax.random.normal(k3, (f, f), dtype=jnp.float32),
            "bb":  0.1 * jax.random.normal(k4, (1, f), dtype=jnp.float32),
            "wnh": 0.1 * jax.random.normal(k5, (f, f), dtype=jnp.float32),
            "wnc": 0.1 * jax.random.normal(k6, (f, f), dtype=jnp.float32),
            "bn":  0.1 * jax.random.normal(k7, (1, f), dtype=jnp.float32),
        }
        return h, adj, params

    key = jax.random.PRNGKey(0)
    k_big, k_small = jax.random.split(key)

    # (1) gridded case: 2x2 grid of (128 dst x 128 src) tiles, f32 edge math.
    h, adj, params = make_inputs(256, 128, k_big)
    out = jax.block_until_ready(graphsage_layer_edgefeat(h, adj, params))
    ref = reference(h, adj, params)
    assert out.shape == ref.shape
    assert jnp.allclose(out, ref, atol=1e-4, rtol=1e-4), (
        "f32 mismatch, max abs err %e" % float(jnp.max(jnp.abs(out - ref))))

    # (2) same graph, full-bf16 edge cube + bf16 MXU operands (v6e/v7x perf path).
    out_bf16 = jax.block_until_ready(
        graphsage_layer_edgefeat(h, adj, params, compute_dtype=jnp.bfloat16))
    assert jnp.allclose(out_bf16, ref, atol=5e-2, rtol=5e-2), (
        "bf16 mismatch, max abs err %e" % float(jnp.max(jnp.abs(out_bf16 - ref))))

    # (3) small single-tile graph (block == full array dims path).
    h2, adj2, params2 = make_inputs(64, 128, k_small)
    out2 = jax.block_until_ready(graphsage_layer_edgefeat(h2, adj2, params2))
    ref2 = reference(h2, adj2, params2)
    assert jnp.allclose(out2, ref2, atol=1e-4, rtol=1e-4), (
        "small-graph mismatch, max abs err %e" % float(jnp.max(jnp.abs(out2 - ref2))))

    print("KERNEL_OK")
</pallas_src>

<mosaic_0001>
module attributes {stable_mosaic.version = 11 : i64} {
  func.func @_project_kernel(%arg0: i32, %arg1: memref<128x128xf32, #tpu.memory_space<vmem>>, %arg2: memref<128x256xf32, #tpu.memory_space<vmem>>, %arg3: memref<1x256xf32, #tpu.memory_space<vmem>>, %arg4: memref<128x256xf32, #tpu.memory_space<vmem>>) attributes {dimension_semantics = [#tpu.dimension_semantics<parallel>], iteration_bounds = array<i64: 2>, scalar_prefetch = 0 : i64, scratch_operands = 0 : i64, tpu.core_type = #tpu.core_type<tc>, window_params = [{transform_indices = @transform_0, window_bounds = array<i64: 128, 128>}, {pipeline_mode = #tpu.pipeline_mode<synchronous>, transform_indices = @transform_1, window_bounds = array<i64: 128, 256>}, {pipeline_mode = #tpu.pipeline_mode<synchronous>, transform_indices = @transform_2, window_bounds = array<i64: 1, 256>}, {transform_indices = @transform_3, window_bounds = array<i64: 128, 256>}]} {
    %c0 = arith.constant 0 : index
    %c0_0 = arith.constant 0 : index
    %0 = vector.load %arg1[%c0, %c0_0] : memref<128x128xf32, #tpu.memory_space<vmem>>, vector<128x128xf32>
    %c0_1 = arith.constant 0 : index
    %c0_2 = arith.constant 0 : index
    %1 = vector.load %arg2[%c0_1, %c0_2] : memref<128x256xf32, #tpu.memory_space<vmem>>, vector<128x256xf32>
    %cst = arith.constant dense<0.000000e+00> : vector<128x256xf32>
    %2 = tpu.matmul %0, %1, %cst {dimension_numbers = #tpu.dot_dimension_numbers<[1], [0], [0], [1], [0, 0, 1, 1], [], []>} : vector<128x128xf32>, vector<128x256xf32>, vector<128x256xf32> -> vector<128x256xf32>
    %c0_3 = arith.constant 0 : index
    %c0_4 = arith.constant 0 : index
    %3 = vector.load %arg3[%c0_3, %c0_4] : memref<1x256xf32, #tpu.memory_space<vmem>>, vector<1x256xf32>
    %4 = vector.broadcast %3 : vector<1x256xf32> to vector<128x256xf32>
    %5 = arith.addf %2, %4 : vector<128x256xf32>
    %6 = vector.extract_strided_slice %5 {offsets = [0, 0], sizes = [128, 128], strides = [1, 1]} : vector<128x256xf32> to vector<128x128xf32>
    %cst_5 = arith.constant 0.000000e+00 : f32
    %7 = vector.broadcast %cst_5 : f32 to vector<128x128xf32>
    %8 = arith.maximumf %6, %7 : vector<128x128xf32>
    %c0_6 = arith.constant 0 : index
    %c0_7 = arith.constant 0 : index
    %9 = vector.load %arg4[%c0_6, %c0_7] : memref<128x256xf32, #tpu.memory_space<vmem>>, vector<128x128xf32>
    tpu.vector_store %arg4[%c0_6, %c0_7], %8 {strides = array<i32>} : memref<128x256xf32, #tpu.memory_space<vmem>>, vector<128x128xf32>,
    %10 = vector.extract_strided_slice %5 {offsets = [0, 128], sizes = [128, 128], strides = [1, 1]} : vector<128x256xf32> to vector<128x128xf32>
    %cst_8 = arith.constant 5.000000e-01 : f32
    %11 = vector.broadcast %cst_8 : f32 to vector<128x128xf32>
    %12 = arith.mulf %10, %11 : vector<128x128xf32>
    %c0_9 = arith.constant 0 : index
    %c128 = arith.constant 128 : index
    %13 = vector.load %arg4[%c0_9, %c128] : memref<128x256xf32, #tpu.memory_space<vmem>>, vector<128x128xf32>
    tpu.vector_store %arg4[%c0_9, %c128], %12 {strides = array<i32>} : memref<128x256xf32, #tpu.memory_space<vmem>>, vector<128x128xf32>,
    return
  }
  func.func @transform_0(%arg0: i32) -> (i32, i32) {
    %c0_i32 = arith.constant 0 : i32
    %c0_i32_0 = arith.constant 0 : i32
    return %arg0, %c0_i32 : i32, i32
  }
  func.func @transform_1(%arg0: i32) -> (i32, i32) {
    %c0_i32 = arith.constant 0 : i32
    %c0_i32_0 = arith.constant 0 : i32
    %c0_i32_1 = arith.constant 0 : i32
    return %c0_i32, %c0_i32_0 : i32, i32
  }
  func.func @transform_2(%arg0: i32) -> (i32, i32) {
    %c0_i32 = arith.constant 0 : i32
    %c0_i32_0 = arith.constant 0 : i32
    %c0_i32_1 = arith.constant 0 : i32
    return %c0_i32, %c0_i32_0 : i32, i32
  }
  func.func @transform_3(%arg0: i32) -> (i32, i32) {
    %c0_i32 = arith.constant 0 : i32
    %c0_i32_0 = arith.constant 0 : i32
    return %arg0, %c0_i32 : i32, i32
  }
}

</mosaic_0001>

<llo_original>
// kernel: tpu_custom_call.1
$region0: #{tpu_custom_call.1}
  #allocation0 [shape = 'u32[]', space=smem, size = 0x4, offset = 0x4, fixed_abs, tag = 'smem constant byte address 0x4 - core index']
  #allocation1 [shape = 'u32[72,128]{1,0:T(1,128)}', space=vmem, size = 0x9000, scoped, tag = 'internal scratch']
  %s0 = inlined_call_operand.hbm [shape: f32[256,128], index: 0, kind: input, shape index: {}]
  %s1 = inlined_call_operand.hbm [shape: f32[128,256], index: 1, kind: input, shape index: {}]
  %s2 = inlined_call_operand.hbm [shape: f32[1,256], index: 2, kind: input, shape index: {}]
  %s3 = inlined_call_operand.hbm [shape: f32[256,256], index: 3, kind: output, shape index: {}]
  %s4 = sld [smem:[#allocation0]]
  $region57: #{tpu_custom_call.1} parent=0
    _
  %s6 = ssub.s32 1, %s4
  %s7 = scalar_select 0, %s6, %s4
  $region1: #{tpu_custom_call.1} parent=0
    #allocation2 [shape = 'u8[131072]{0}', space=vmem, size = 0x20000, scoped, tag = 'input window, operand 0']
    #allocation3 [shape = 's32[2]{0}', space=sflag, size = 0x8, scoped, tag = 'scoped memory for tpu_custom_call.1']
    #allocation4 [shape = 's32[2]{0}', space=sflag, size = 0x8, scoped, tag = 'scoped memory for tpu_custom_call.1']
    #allocation5 [shape = 'u8[131072]{0}', space=vmem, size = 0x20000, scoped, tag = 'input window, operand 1, single buffered']
    #allocation6 [shape = 's32[1]{0}', space=sflag, size = 0x4, scoped, tag = 'scoped memory for tpu_custom_call.1']
    #allocation7 [shape = 'u8[1024]{0}', space=vmem, size = 0x400, scoped, tag = 'input window, operand 2, single buffered']
    #allocation8 [shape = 'u8[262144]{0}', space=vmem, size = 0x40000, scoped, tag = 'output window, operand 0']
    %8 = vsyncpa [#allocation3], 0
    %s9 = scalar_lea.sflag [#allocation3], 1
    %10 = vsyncpa %s9, 0
    %11 = vsyncpa [#allocation6], 0
    %12 = vsyncpa [#allocation4], 0
    %s13 = scalar_lea.sflag [#allocation4], 1
    %14 = vsyncpa %s13, 0
    loop: start=0, step=1, limit=4
    $region2: #{tpu_custom_call.1} parent=1 // loop_pre_header
      _
    $region3: #{tpu_custom_call.1} parent=1 // loop_header
      %s16 = sphi 0, %s20
      %p17 = scmp.ge.s32.totalorder %s16, 4
      %s26 = sphi 0, %s28
      %s29 = sphi 0, %s26
      %s30 = sphi 0, %s29
      %s46 = sphi 0, %s30
      %s50 = sphi 0, %s50
      %s52 = sphi 0, %s50
      %s53 = sphi 0, %s52
      %s67 = sphi 0, %s53
      %s71 = sphi 0, %s71
      %s73 = sphi 0, %s71
      %s74 = sphi 0, %s73
      %s88 = sphi 0, %s74
      %s94 = sphi 0, %s96
      %s97 = sphi 0, %s94
      %s98 = sphi 0, %s97
      %s114 = sphi 0, %s98
    $region4: #{tpu_custom_call.1} parent=1 // loop_header_branch
      %19 = sbr.rel (%p17) target = $region8
    $region5: #{tpu_custom_call.1} parent=1 // loop_body
      %s21 = ssub.s32 %s16, 1
      %s22 = ssub.s32 %s16, 2
      %s23 = sadd.s32 %s16, 1
      %s24 = ssub.s32 %s16, %s23
      %p25 = scmp.eq.s32.totalorder %s24, 0
      %s27 = sadd.s32 %s26, 1
      %s28 = scalar_select %p25, %s26, %s27
      %p31 = pneg %p25
      %p32 = scmp.eq.s32.totalorder %s16, 1
      %p33 = por %p31, %p32
      %p34 = scmp.ne.s32.totalorder %s26, %s29
      %p35 = scmp.eq.s32.totalorder %s16, 0
      %p36 = por %p34, %p35
      %p37 = scmp.ne.s32.totalorder %s26, %s29
      %p38 = scmp.eq.s32.totalorder %s21, 1
      %p39 = por %p37, %p38
      %p40 = scmp.ne.s32.totalorder %s29, %s30
      %p41 = scmp.eq.s32.totalorder %s21, 0
      %p42 = por %p40, %p41
      %p43 = scmp.ne.s32.totalorder %s29, %s30
      %p44 = scmp.eq.s32.totalorder %s22, 1
      %p45 = por %p43, %p44
      %p47 = scmp.ne.s32.totalorder %s30, %s46
      %p48 = scmp.eq.s32.totalorder %s22, 0
      %p49 = por %p47, %p48
      %s51 = sadd.s32 %s50, 1
      %p54 = scmp.eq.s32.totalorder %s16, 1
      %p55 = scmp.ne.s32.totalorder %s50, %s52
      %p56 = scmp.eq.s32.totalorder %s16, 0
      %p57 = por %p55, %p56
      %p58 = scmp.ne.s32.totalorder %s50, %s52
      %p59 = scmp.eq.s32.totalorder %s21, 1
      %p60 = por %p58, %p59
      %p61 = scmp.ne.s32.totalorder %s52, %s53
      %p62 = scmp.eq.s32.totalorder %s21, 0
      %p63 = por %p61, %p62
      %p64 = scmp.ne.s32.totalorder %s52, %s53
      %p65 = scmp.eq.s32.totalorder %s22, 1
      %p66 = por %p64, %p65
      %p68 = scmp.ne.s32.totalorder %s53, %s67
      %p69 = scmp.eq.s32.totalorder %s22, 0
      %p70 = por %p68, %p69
      %s72 = sadd.s32 %s71, 1
      %p75 = scmp.eq.s32.totalorder %s16, 1
      %p76 = scmp.ne.s32.totalorder %s71, %s73
      %p77 = scmp.eq.s32.totalorder %s16, 0
      %p78 = por %p76, %p77
      %p79 = scmp.ne.s32.totalorder %s71, %s73
      %p80 = scmp.eq.s32.totalorder %s21, 1
      %p81 = por %p79, %p80
      %p82 = scmp.ne.s32.totalorder %s73, %s74
      %p83 = scmp.eq.s32.totalorder %s21, 0
      %p84 = por %p82, %p83
      %p85 = scmp.ne.s32.totalorder %s73, %s74
      %p86 = scmp.eq.s32.totalorder %s22, 1
      %p87 = por %p85, %p86
      %p89 = scmp.ne.s32.totalorder %s74, %s88
      %p90 = scmp.eq.s32.totalorder %s22, 0
      %p91 = por %p89, %p90
      %s92 = ssub.s32 %s16, %s23
      %p93 = scmp.eq.s32.totalorder %s92, 0
      %s95 = sadd.s32 %s94, 1
      %s96 = scalar_select %p93, %s94, %s95
      %p99 = pneg %p93
      %p100 = scmp.eq.s32.totalorder %s16, 1
      %p101 = por %p99, %p100
      %p102 = scmp.ne.s32.totalorder %s94, %s97
      %p103 = scmp.eq.s32.totalorder %s16, 0
      %p104 = por %p102, %p103
      %p105 = scmp.ne.s32.totalorder %s94, %s97
      %p106 = scmp.eq.s32.totalorder %s21, 1
      %p107 = por %p105, %p106
      %p108 = scmp.ne.s32.totalorder %s97, %s98
      %p109 = scmp.eq.s32.totalorder %s21, 0
      %p110 = por %p108, %p109
      %p111 = scmp.ne.s32.totalorder %s97, %s98
      %p112 = scmp.eq.s32.totalorder %s22, 1
      %p113 = por %p111, %p112
      %p115 = scmp.ne.s32.totalorder %s98, %s114
      %p116 = scmp.eq.s32.totalorder %s22, 0
      %p117 = por %p115, %p116
      %p118 = scmp.le.s32.totalorder 1, %s16
      %p119 = scmp.lt.s32.totalorder %s16, 3
      %p120 = pnand %p118, %p119
      %p121 = pneg %p120
      // Predicated region
      $region9: #{tpu_custom_call.1} parent=5 // pred_check
        _
      $region10: #{tpu_custom_call.1} parent=5 // pred_check_branch
        %123 = sbr.rel (%p120) target = $region12
      $region11: #{tpu_custom_call.1} parent=5 // pred_region
        %s124 = ssub.s32 %s16, 1
        // Predicated region
        $region13: #{tpu_custom_call.1} parent=11 // pred_check
          %p125 = pneg %p63
        $region14: #{tpu_custom_call.1} parent=11 // pred_check_branch
          %127 = sbr.rel (%p125) target = $region16
        $region15: #{tpu_custom_call.1} parent=11 // pred_region
          %129 = vsyncadd [#allocation6], 0
          %s130 = sshll.u32 %s1, 4
          %s131 = int_to_ptr.hbm [resolvable:$true] %s130
          %s132 = sshll.u32 [#allocation5], 4
          %s133 = int_to_ptr.vmem [resolvable:$true] %s132
          %138 = dma.hbm_to_vmem [thread:$0]  %s131, 4096, %s133, [#allocation6], 256, 256, 16
        $region16: #{tpu_custom_call.1} parent=11 // pred_fallthru
          _
        // Predicated region
        $region17: #{tpu_custom_call.1} parent=11 // pred_check
          %p139 = pneg %p84
        $region18: #{tpu_custom_call.1} parent=11 // pred_check_branch
          %141 = sbr.rel (%p139) target = $region20
        $region19: #{tpu_custom_call.1} parent=11 // pred_region
          %143 = vsyncadd [#allocation6], 0
          %s145 = sshll.u32 %s2, 4
          %s146 = int_to_ptr.hbm [resolvable:$true] %s145
          %s147 = sshll.u32 [#allocation7], 4
          %s148 = int_to_ptr.vmem [resolvable:$true] %s147
          %150 = dma.hbm_to_vmem [thread:$0]  %s146, 32, %s148, [#allocation6]
        $region20: #{tpu_custom_call.1} parent=11 // pred_fallthru
          _
      $region12: #{tpu_custom_call.1} parent=5 // pred_fallthru
        _
      %p151 = scmp.lt.s32.totalorder %s16, 2
      // Predicated region
      $region21: #{tpu_custom_call.1} parent=5 // pred_check
        %p152 = pneg %p151
      $region22: #{tpu_custom_call.1} parent=5 // pred_check_branch
        %154 = sbr.rel (%p152) target = $region24
      $region23: #{tpu_custom_call.1} parent=5 // pred_region
        // Predicated region
        $region25: #{tpu_custom_call.1} parent=23 // pred_check
          %p155 = pneg %p36
        $region26: #{tpu_custom_call.1} parent=23 // pred_check_branch
          %157 = sbr.rel (%p155) target = $region28
        $region27: #{tpu_custom_call.1} parent=23 // pred_region
          %s158 = sand.u32 %s26, 1
          %s159 = scalar_lea.sflag [#allocation3], %s158
          %s160 = sand.u32 %s26, 1
          %s161 = smul.addr %s160, 128
          %s162 = scalar_lea.vmem [#allocation2], %s161
          %s163 = smul.u32 16, %s16
          %165 = vsyncadd %s159, 0
          %s166 = smul.addr %s163, 8
          %s167 = scalar_lea.hbm %s0, %s166
          %s168 = sshll.u32 %s167, 4
          %s169 = int_to_ptr.hbm [resolvable:$true] %s168
          %s170 = sshll.u32 %s162, 4
          %s171 = int_to_ptr.vmem [resolvable:$true] %s170
          %176 = dma.hbm_to_vmem [thread:$0]  %s169, 2048, %s171, %s159, 128, 128, 8
        $region28: #{tpu_custom_call.1} parent=23 // pred_fallthru
          _
      $region24: #{tpu_custom_call.1} parent=5 // pred_fallthru
        _
      %p177 = scmp.le.s32.totalorder 1, %s16
      %p178 = scmp.lt.s32.totalorder %s16, 3
      %p179 = pnand %p177, %p178
      %p180 = pneg %p179
      // Predicated region
      $region29: #{tpu_custom_call.1} parent=5 // pred_check
        _
      $region30: #{tpu_custom_call.1} parent=5 // pred_check_branch
        %182 = sbr.rel (%p179) target = $region32
      $region31: #{tpu_custom_call.1} parent=5 // pred_region
        %s183 = ssub.s32 %s16, 1
        %s184 = sand.u32 %s29, 1
        %s185 = scalar_lea.sflag [#allocation3], %s184
        %s186 = sand.u32 %s29, 1
        %s187 = smul.addr %s186, 128
        %s188 = scalar_lea.vmem [#allocation2], %s187
        // Predicated region
        $region33: #{tpu_custom_call.1} parent=31 // pred_check
          %p189 = pneg %p42
        $region34: #{tpu_custom_call.1} parent=31 // pred_check_branch
          %191 = sbr.rel (%p189) target = $region36
        $region35: #{tpu_custom_call.1} parent=31 // pred_region
          %193 = dma.done %s185, 2048
        $region36: #{tpu_custom_call.1} parent=31 // pred_fallthru
          _
        // Predicated region
        $region37: #{tpu_custom_call.1} parent=31 // pred_check
          %p194 = pneg %p63
        $region38: #{tpu_custom_call.1} parent=31 // pred_check_branch
          %196 = sbr.rel (%p194) target = $region40
        $region39: #{tpu_custom_call.1} parent=31 // pred_region
          %198 = dma.done [#allocation6], 4096
        $region40: #{tpu_custom_call.1} parent=31 // pred_fallthru
          _
        // Predicated region
        $region41: #{tpu_custom_call.1} parent=31 // pred_check
          %p199 = pneg %p84
        $region42: #{tpu_custom_call.1} parent=31 // pred_check_branch
          %201 = sbr.rel (%p199) target = $region44
        $region43: #{tpu_custom_call.1} parent=31 // pred_region
          %203 = dma.done [#allocation6], 32
        $region44: #{tpu_custom_call.1} parent=31 // pred_fallthru
          _
        %s204 = sand.u32 %s29, 1
        %s205 = scalar_lea.sflag [#allocation3], %s204
        %s206 = sand.u32 %s29, 1
        %s207 = smul.addr %s206, 128
        %s208 = scalar_lea.vmem [#allocation2], %s207
        %p209 = pneg %p42
        %p210 = pneg %p39
        %p211 = pneg %p63
        %p212 = pneg %p60
        %p213 = pneg %p84
        %p214 = pneg %p81
        %p215 = pneg %p110
        %p216 = pneg %p107
        %s217 = sand.u32 %s97, 1
        %s218 = scalar_lea.sflag [#allocation4], %s217
        %s219 = sand.u32 %s97, 1
        %s220 = smul.addr %s219, 256
        %s221 = scalar_lea.vmem [#allocation8], %s220
        %s222 = smul.u32 16, %s21
        %s223 = smul.u32 16, %s21
        %v224 = vld [vmem:[%s188] sm:$0xff]
        %v225 = vld [vmem:[%s188 + $0x8] sm:$0xff]
        %v226 = vld [vmem:[%s188 + $0x10] sm:$0xff]
        %v227 = vld [vmem:[%s188 + $0x18] sm:$0xff]
        %v228 = vld [vmem:[%s188 + $0x20] sm:$0xff]
        %v229 = vld [vmem:[%s188 + $0x28] sm:$0xff]
        %v230 = vld [vmem:[%s188 + $0x30] sm:$0xff]
        %v231 = vld [vmem:[%s188 + $0x38] sm:$0xff]
        %v232 = vld [vmem:[%s188 + $0x40] sm:$0xff]
        %v233 = vld [vmem:[%s188 + $0x48] sm:$0xff]
        %v234 = vld [vmem:[%s188 + $0x50] sm:$0xff]
        %v235 = vld [vmem:[%s188 + $0x58] sm:$0xff]
        %v236 = vld [vmem:[%s188 + $0x60] sm:$0xff]
        %v237 = vld [vmem:[%s188 + $0x68] sm:$0xff]
        %v238 = vld [vmem:[%s188 + $0x70] sm:$0xff]
        %v239 = vld [vmem:[%s188 + $0x78] sm:$0xff]
        %v240 = vld [vmem:[#allocation5] sm:$0xff]
        %v241 = vld [vmem:[#allocation5 + $0x8] sm:$0xff]
        %v242 = vld [vmem:[#allocation5 + $0x10] sm:$0xff]
        %v243 = vld [vmem:[#allocation5 + $0x18] sm:$0xff]
        %v244 = vld [vmem:[#allocation5 + $0x20] sm:$0xff]
        %v245 = vld [vmem:[#allocation5 + $0x28] sm:$0xff]
        %v246 = vld [vmem:[#allocation5 + $0x30] sm:$0xff]
        %v247 = vld [vmem:[#allocation5 + $0x38] sm:$0xff]
        %v248 = vld [vmem:[#allocation5 + $0x40] sm:$0xff]
        %v249 = vld [vmem:[#allocation5 + $0x48] sm:$0xff]
        %v250 = vld [vmem:[#allocation5 + $0x50] sm:$0xff]
        %v251 = vld [vmem:[#allocation5 + $0x58] sm:$0xff]
        %v252 = vld [vmem:[#allocation5 + $0x60] sm:$0xff]
        %v253 = vld [vmem:[#allocation5 + $0x68] sm:$0xff]
        %v254 = vld [vmem:[#allocation5 + $0x70] sm:$0xff]
        %v255 = vld [vmem:[#allocation5 + $0x78] sm:$0xff]
        %v256 = vld [vmem:[#allocation5 + $0x80] sm:$0xff]
        %v257 = vld [vmem:[#allocation5 + $0x88] sm:$0xff]
        %v258 = vld [vmem:[#allocation5 + $0x90] sm:$0xff]
        %v259 = vld [vmem:[#allocation5 + $0x98] sm:$0xff]
        %v260 = vld [vmem:[#allocation5 + $0xa0] sm:$0xff]
        %v261 = vld [vmem:[#allocation5 + $0xa8] sm:$0xff]
        %v262 = vld [vmem:[#allocation5 + $0xb0] sm:$0xff]
        %v263 = vld [vmem:[#allocation5 + $0xb8] sm:$0xff]
        %v264 = vld [vmem:[#allocation5 + $0xc0] sm:$0xff]
        %v265 = vld [vmem:[#allocation5 + $0xc8] sm:$0xff]
        %v266 = vld [vmem:[#allocation5 + $0xd0] sm:$0xff]
        %v267 = vld [vmem:[#allocation5 + $0xd8] sm:$0xff]
        %v268 = vld [vmem:[#allocation5 + $0xe0] sm:$0xff]
        %v269 = vld [vmem:[#allocation5 + $0xe8] sm:$0xff]
        %v270 = vld [vmem:[#allocation5 + $0xf0] sm:$0xff]
        %v271 = vld [vmem:[#allocation5 + $0xf8] sm:$0xff]
        %v272 = vld [vmem:[#allocation7] sm:$0x3]
        %v274 = vperm.slane %v272, 0
        %v275 = vperm.slane %v272, 1
        %278 = vmatpush.msra.mxu0 %v270
        %279 = vmatpush.msra.mxu0 %v268
        %280 = vmatpush.msra.mxu0 %v266
        %281 = vmatpush.msra.mxu0 %v264
        %282 = vmatpush.msra.mxu0 %v262
        %283 = vmatpush.msra.mxu0 %v260
        %284 = vmatpush.msra.mxu0 %v258
        %285 = vmatpush.msra.mxu0 %v256
        %286 = vmatpush.msra.mxu0 %v254
        %287 = vmatpush.msra.mxu0 %v252
        %288 = vmatpush.msra.mxu0 %v250
        %289 = vmatpush.msra.mxu0 %v248
        %290 = vmatpush.msra.mxu0 %v246
        %291 = vmatpush.msra.mxu0 %v244
        %292 = vmatpush.msra.mxu0 %v242
        %293 = vmatpush.msra.mxu0 %v240
        %294 = vmatmul.f32.gmra.mxu0 %v224
        %v295 = vpop.f32.mrf.mxu0
        %v296 = vadd.f32 %v274, %v295
        %297 = vmatmul.f32.gmra.mxu0 %v225
        %v298 = vpop.f32.mrf.mxu0
        %v299 = vadd.f32 %v274, %v298
        %300 = vmatmul.f32.gmra.mxu0 %v226
        %v301 = vpop.f32.mrf.mxu0
        %v302 = vadd.f32 %v274, %v301
        %303 = vmatmul.f32.gmra.mxu0 %v227
        %v304 = vpop.f32.mrf.mxu0
        %v305 = vadd.f32 %v274, %v304
        %306 = vmatmul.f32.gmra.mxu0 %v228
        %v307 = vpop.f32.mrf.mxu0
        %v308 = vadd.f32 %v274, %v307
        %309 = vmatmul.f32.gmra.mxu0 %v229
        %v310 = vpop.f32.mrf.mxu0
        %v311 = vadd.f32 %v274, %v310
        %312 = vmatmul.f32.gmra.mxu0 %v230
        %v313 = vpop.f32.mrf.mxu0
        %v314 = vadd.f32 %v274, %v313
        %315 = vmatmul.f32.gmra.mxu0 %v231
        %v316 = vpop.f32.mrf.mxu0
        %v317 = vadd.f32 %v274, %v316
        %318 = vmatmul.f32.gmra.mxu0 %v232
        %v319 = vpop.f32.mrf.mxu0
        %v320 = vadd.f32 %v274, %v319
        %321 = vmatmul.f32.gmra.mxu0 %v233
        %v322 = vpop.f32.mrf.mxu0
        %v323 = vadd.f32 %v274, %v322
        %324 = vmatmul.f32.gmra.mxu0 %v234
        %v325 = vpop.f32.mrf.mxu0
        %v326 = vadd.f32 %v274, %v325
        %327 = vmatmul.f32.gmra.mxu0 %v235
        %v328 = vpop.f32.mrf.mxu0
        %v329 = vadd.f32 %v274, %v328
        %330 = vmatmul.f32.gmra.mxu0 %v236
        %v331 = vpop.f32.mrf.mxu0
        %v332 = vadd.f32 %v274, %v331
        %333 = vmatmul.f32.gmra.mxu0 %v237
        %v334 = vpop.f32.mrf.mxu0
        %v335 = vadd.f32 %v274, %v334
        %336 = vmatmul.f32.gmra.mxu0 %v238
        %v337 = vpop.f32.mrf.mxu0
        %v338 = vadd.f32 %v274, %v337
        %339 = vmatmul.f32.gmra.mxu0 %v239
        %v340 = vpop.f32.mrf.mxu0
        %v341 = vadd.f32 %v274, %v340
        %342 = vdwg.mxu0
        %343 = vmatpush.msra.mxu0 %v271
        %344 = vmatpush.msra.mxu0 %v269
        %345 = vmatpush.msra.mxu0 %v267
        %346 = vmatpush.msra.mxu0 %v265
        %347 = vmatpush.msra.mxu0 %v263
        %348 = vmatpush.msra.mxu0 %v261
        %349 = vmatpush.msra.mxu0 %v259
        %350 = vmatpush.msra.mxu0 %v257
        %351 = vmatpush.msra.mxu0 %v255
        %352 = vmatpush.msra.mxu0 %v253
        %353 = vmatpush.msra.mxu0 %v251
        %354 = vmatpush.msra.mxu0 %v249
        %355 = vmatpush.msra.mxu0 %v247
        %356 = vmatpush.msra.mxu0 %v245
        %357 = vmatpush.msra.mxu0 %v243
        %358 = vmatpush.msra.mxu0 %v241
        %359 = vmatmul.f32.gmra.mxu0 %v224
        %v360 = vpop.f32.mrf.mxu0
        %v361 = vadd.f32 %v275, %v360
        %362 = vmatmul.f32.gmra.mxu0 %v225
        %v363 = vpop.f32.mrf.mxu0
        %v364 = vadd.f32 %v275, %v363
        %365 = vmatmul.f32.gmra.mxu0 %v226
        %v366 = vpop.f32.mrf.mxu0
        %v367 = vadd.f32 %v275, %v366
        %368 = vmatmul.f32.gmra.mxu0 %v227
        %v369 = vpop.f32.mrf.mxu0
        %v370 = vadd.f32 %v275, %v369
        %371 = vmatmul.f32.gmra.mxu0 %v228
        %v372 = vpop.f32.mrf.mxu0
        %v373 = vadd.f32 %v275, %v372
        %374 = vmatmul.f32.gmra.mxu0 %v229
        %v375 = vpop.f32.mrf.mxu0
        %v376 = vadd.f32 %v275, %v375
        %377 = vmatmul.f32.gmra.mxu0 %v230
        %v378 = vpop.f32.mrf.mxu0
        %v379 = vadd.f32 %v275, %v378
        %380 = vmatmul.f32.gmra.mxu0 %v231
        %v381 = vpop.f32.mrf.mxu0
        %v382 = vadd.f32 %v275, %v381
        %383 = vmatmul.f32.gmra.mxu0 %v232
        %v384 = vpop.f32.mrf.mxu0
        %v385 = vadd.f32 %v275, %v384
        %386 = vmatmul.f32.gmra.mxu0 %v233
        %v387 = vpop.f32.mrf.mxu0
        %v388 = vadd.f32 %v275, %v387
        %389 = vmatmul.f32.gmra.mxu0 %v234
        %v390 = vpop.f32.mrf.mxu0
        %v391 = vadd.f32 %v275, %v390
        %392 = vmatmul.f32.gmra.mxu0 %v235
        %v393 = vpop.f32.mrf.mxu0
        %v394 = vadd.f32 %v275, %v393
        %395 = vmatmul.f32.gmra.mxu0 %v236
        %v396 = vpop.f32.mrf.mxu0
        %v397 = vadd.f32 %v275, %v396
        %398 = vmatmul.f32.gmra.mxu0 %v237
        %v399 = vpop.f32.mrf.mxu0
        %v400 = vadd.f32 %v275, %v399
        %401 = vmatmul.f32.gmra.mxu0 %v238
        %v402 = vpop.f32.mrf.mxu0
        %v403 = vadd.f32 %v275, %v402
        %404 = vmatmul.f32.gmra.mxu0 %v239
        %v405 = vpop.f32.mrf.mxu0
        %v406 = vadd.f32 %v275, %v405
        %407 = vdwg.mxu0
        %v408 = vmax.f32 %v296, 0.0
        %v409 = vmax.f32 %v299, 0.0
        %v410 = vmax.f32 %v302, 0.0
        %v411 = vmax.f32 %v305, 0.0
        %v412 = vmax.f32 %v308, 0.0
        %v413 = vmax.f32 %v311, 0.0
        %v414 = vmax.f32 %v314, 0.0
        %v415 = vmax.f32 %v317, 0.0
        %v416 = vmax.f32 %v320, 0.0
        %v417 = vmax.f32 %v323, 0.0
        %v418 = vmax.f32 %v326, 0.0
        %v419 = vmax.f32 %v329, 0.0
        %v420 = vmax.f32 %v332, 0.0
        %v421 = vmax.f32 %v335, 0.0
        %v422 = vmax.f32 %v338, 0.0
        %v423 = vmax.f32 %v341, 0.0
        %424 = vst [vmem:[%s221] sm:$0xff] %v408
        %425 = vst [vmem:[%s221 + $0x10] sm:$0xff] %v409
        %426 = vst [vmem:[%s221 + $0x20] sm:$0xff] %v410
        %427 = vst [vmem:[%s221 + $0x30] sm:$0xff] %v411
        %428 = vst [vmem:[%s221 + $0x40] sm:$0xff] %v412
        %429 = vst [vmem:[%s221 + $0x50] sm:$0xff] %v413
        %430 = vst [vmem:[%s221 + $0x60] sm:$0xff] %v414
        %431 = vst [vmem:[%s221 + $0x70] sm:$0xff] %v415
        %432 = vst [vmem:[%s221 + $0x80] sm:$0xff] %v416
        %433 = vst [vmem:[%s221 + $0x90] sm:$0xff] %v417
        %434 = vst [vmem:[%s221 + $0xa0] sm:$0xff] %v418
        %435 = vst [vmem:[%s221 + $0xb0] sm:$0xff] %v419
        %436 = vst [vmem:[%s221 + $0xc0] sm:$0xff] %v420
        %437 = vst [vmem:[%s221 + $0xd0] sm:$0xff] %v421
        %438 = vst [vmem:[%s221 + $0xe0] sm:$0xff] %v422
        %439 = vst [vmem:[%s221 + $0xf0] sm:$0xff] %v423
        %v440 = vmul.f32 %v361, 0.5
        %v441 = vmul.f32 %v364, 0.5
        %v442 = vmul.f32 %v367, 0.5
        %v443 = vmul.f32 %v370, 0.5
        %v444 = vmul.f32 %v373, 0.5
        %v445 = vmul.f32 %v376, 0.5
        %v446 = vmul.f32 %v379, 0.5
        %v447 = vmul.f32 %v382, 0.5
        %v448 = vmul.f32 %v385, 0.5
        %v449 = vmul.f32 %v388, 0.5
        %v450 = vmul.f32 %v391, 0.5
        %v451 = vmul.f32 %v394, 0.5
        %v452 = vmul.f32 %v397, 0.5
        %v453 = vmul.f32 %v400, 0.5
        %v454 = vmul.f32 %v403, 0.5
        %v455 = vmul.f32 %v406, 0.5
        %456 = vst [vmem:[%s221 + $0x8] sm:$0xff] %v440
        %457 = vst [vmem:[%s221 + $0x18] sm:$0xff] %v441
        %458 = vst [vmem:[%s221 + $0x28] sm:$0xff] %v442
        %459 = vst [vmem:[%s221 + $0x38] sm:$0xff] %v443
        %460 = vst [vmem:[%s221 + $0x48] sm:$0xff] %v444
        %461 = vst [vmem:[%s221 + $0x58] sm:$0xff] %v445
        %462 = vst [vmem:[%s221 + $0x68] sm:$0xff] %v446
        %463 = vst [vmem:[%s221 + $0x78] sm:$0xff] %v447
        %464 = vst [vmem:[%s221 + $0x88] sm:$0xff] %v448
        %465 = vst [vmem:[%s221 + $0x98] sm:$0xff] %v449
        %466 = vst [vmem:[%s221 + $0xa8] sm:$0xff] %v450
        %467 = vst [vmem:[%s221 + $0xb8] sm:$0xff] %v451
        %468 = vst [vmem:[%s221 + $0xc8] sm:$0xff] %v452
        %469 = vst [vmem:[%s221 + $0xd8] sm:$0xff] %v453
        %470 = vst [vmem:[%s221 + $0xe8] sm:$0xff] %v454
        %471 = vst [vmem:[%s221 + $0xf8] sm:$0xff] %v455
        %s472 = sand.u32 %s97, 1
        %s473 = scalar_lea.sflag [#allocation4], %s472
        %s474 = sand.u32 %s97, 1
        %s475 = smul.addr %s474, 256
        %s476 = scalar_lea.vmem [#allocation8], %s475
        // Predicated region
        $region45: #{tpu_custom_call.1} parent=31 // pred_check
          %p477 = pneg %p107
        $region46: #{tpu_custom_call.1} parent=31 // pred_check_branch
          %479 = sbr.rel (%p477) target = $region48
        $region47: #{tpu_custom_call.1} parent=31 // pred_region
          %s480 = smul.u32 16, %s21
          %482 = vsyncadd %s473, 0
          %s483 = smul.addr %s480, 2
          %s484 = smul.addr %s483, 8
          %s485 = scalar_lea.hbm %s3, %s484
          %s486 = sshll.u32 %s476, 4
          %s487 = int_to_ptr.vmem [resolvable:$true] %s486
          %s488 = sshll.u32 %s485, 4
          %s489 = int_to_ptr.hbm [resolvable:$true] %s488
          %494 = dma.vmem_to_hbm [thread:$0]  %s487, 4096, %s489, %s473, 256, 256, 16
        $region48: #{tpu_custom_call.1} parent=31 // pred_fallthru
          _
      $region32: #{tpu_custom_call.1} parent=5 // pred_fallthru
        _
      %p495 = scmp.le.s32.totalorder 2, %s16
      // Predicated region
      $region49: #{tpu_custom_call.1} parent=5 // pred_check
        %p496 = pneg %p495
      $region50: #{tpu_custom_call.1} parent=5 // pred_check_branch
        %498 = sbr.rel (%p496) target = $region52
      $region51: #{tpu_custom_call.1} parent=5 // pred_region
        %s499 = ssub.s32 %s16, 2
        // Predicated region
        $region53: #{tpu_custom_call.1} parent=51 // pred_check
          %p500 = pneg %p113
        $region54: #{tpu_custom_call.1} parent=51 // pred_check_branch
          %502 = sbr.rel (%p500) target = $region56
        $region55: #{tpu_custom_call.1} parent=51 // pred_region
          %s503 = sand.u32 %s98, 1
          %s504 = scalar_lea.sflag [#allocation4], %s503
          %s505 = sand.u32 %s98, 1
          %s506 = smul.addr %s505, 256
          %s507 = scalar_lea.vmem [#allocation8], %s506
          %509 = dma.done %s504, 4096
        $region56: #{tpu_custom_call.1} parent=51 // pred_fallthru
          _
      $region52: #{tpu_custom_call.1} parent=5 // pred_fallthru
        _
    $region6: #{tpu_custom_call.1} parent=1 // loop_footer
      %s20 = sadd.s32 1, %s16
    $region7: #{tpu_custom_call.1} parent=1 // loop_footer_branch
      %15 = sbr.rel target = $region3
    $region8: #{tpu_custom_call.1} parent=1 // loop_exit
      _
    %510 = vsyncpa [#allocation3], 1
    %s511 = scalar_lea.sflag [#allocation3], 1
    %512 = vsyncpa %s511, 1
    %513 = vsyncpa [#allocation6], 1
    %514 = vsyncpa [#allocation4], 1
    %s515 = scalar_lea.sflag [#allocation4], 1
    %516 = vsyncpa %s515, 1

</llo_original>
